<compile_context>
chip_gen: v6e
topology: v6e:2x2x1
jax: 0.10.0
libtpu: 0.0.40
codegen_flags: <defaults>
</compile_context>

<pallas_src>
import functools
import math

import jax
import jax.numpy as jnp
from jax.experimental import pallas as pl
from jax.experimental.pallas import tpu as pltpu


def _cdiv(a, b):
    return -(-a // b)


# -----------------------------------------------------------------------------
# One-time probe: does pltpu.roll(x, 1, axis=0) match np.roll semantics on this
# backend?  If it does not (or fails to lower), fall back to a concat shift.
# -----------------------------------------------------------------------------
_ROLL_MATCHES_NP = None


def _roll_matches_np_roll():
    global _ROLL_MATCHES_NP
    if _ROLL_MATCHES_NP is None:
        def probe(x_ref, o_ref):
            o_ref[...] = pltpu.roll(x_ref[...], 1, 0)

        try:
            x = jax.lax.broadcasted_iota(jnp.float32, (8, 128), 0)
            out = pl.pallas_call(
                probe,
                out_shape=jax.ShapeDtypeStruct((8, 128), jnp.float32))(x)
            _ROLL_MATCHES_NP = bool(jnp.all(out == jnp.roll(x, 1, axis=0)))
        except Exception:   # conservative fallback (e.g. non-TPU backend)
            _ROLL_MATCHES_NP = False
    return _ROLL_MATCHES_NP


# -----------------------------------------------------------------------------
# Kernel
# -----------------------------------------------------------------------------
def _mpe_psn_kernel(*refs, use_hw_prng, use_roll, d_total, tile_d, mask_lanes):
    if use_hw_prng:
        seed_ref, thr_ref, x_ref, tau_ref, coef_ref, o_ref, loss_ref = refs
    else:
        thr_ref, x_ref, u_ref, tau_ref, coef_ref, o_ref, loss_ref = refs

    thr = thr_ref[0]
    x = x_ref[0].astype(jnp.float32)                       # (rows, tile_d)
    rows = x.shape[0]

    sig = jax.nn.sigmoid(x)                                # EUP (free slot)
    if use_hw_prng:
        # Independent stream per (batch-group, D-tile) block.  NOTE: callers
        # must vary `seed` across training steps or Bernoulli draws repeat.
        block_id = pl.program_id(0) * pl.num_programs(1) + pl.program_id(1)
        pltpu.prng_seed(seed_ref[0], block_id)
        bits = pltpu.prng_random_bits(x.shape)
        if bits.dtype != jnp.uint32:
            bits = pltpu.bitcast(bits, jnp.uint32)
        # Integer-domain Bernoulli: P(bern=1) = sig.  Compare the top 24 random
        # bits against sig * 2^24 (fits int32 even at sig == 1.0, where
        # torch.bernoulli deterministically returns 1 -> bern always true).
        rnd = pltpu.bitcast(bits >> 8, jnp.int32)
        bern = rnd < (sig * 16777216.0).astype(jnp.int32)
    else:
        bern = u_ref[0].astype(jnp.float32) < sig
    mem_hat = jnp.where(bern, 0.0, x)                      # (1 - bern) * x

    # Previous-time-step value: shift one row down the sublane axis.  The
    # t == 0 reset (torch's v_0 concat), the tau factor, and the guard against
    # leaking the previous packed batch element's last step are all folded into
    # the (rows, 1) tau_ref multiplier (zero wherever row % T == 0), so the
    # roll's wrap-around row is harmless.
    if rows > 1 and use_roll and rows % 8 == 0:
        shifted = pltpu.roll(mem_hat, 1, 0)                # XLU rotate, ~free
    elif rows > 1:
        shifted = jnp.concatenate(
            [jnp.zeros((1, x.shape[1]), jnp.float32), mem_hat[:rows - 1, :]],
            axis=0)
    else:
        shifted = jnp.zeros_like(mem_hat)

    mem_memo = shifted * tau_ref[...] + x
    spike = (mem_memo - thr) > 0.0                         # TriangularSurrogate
    o_ref[0] = spike.astype(o_ref.dtype)

    # mem_real = (1 - spike) * mem_memo;  diff = mem_hat - mem_real  (fused)
    diff = jnp.where(spike, mem_hat, mem_hat - mem_memo)
    if mask_lanes:
        # Ragged last D-tile: lanes >= d_total hold junk from the partial-block
        # read; their o_t writes are dropped by the pipeline, but they must not
        # pollute the loss.
        lane = jax.lax.broadcasted_iota(jnp.int32, diff.shape, 1)
        diff = jnp.where(pl.program_id(1) * tile_d + lane < d_total, diff, 0.0)

    # Reduce over lanes first (XLU), then weight by coef (varies along T only).
    row_sums = jnp.sum(diff * diff, axis=1, keepdims=True)            # (rows,1)
    loss_ref[0, 0] = jnp.sum(row_sums * coef_ref[...], axis=0, keepdims=True)


# -----------------------------------------------------------------------------
# Tiling / wrapper
# -----------------------------------------------------------------------------
def _block_bytes_target():
    """~2 MiB of x per block; ~1 MiB on v5e (lower HBM BW, small scoped VMEM)."""
    try:
        kind = jax.devices()[0].device_kind.lower()
    except Exception:
        kind = ""
    if "v5 lite" in kind or "v5e" in kind or "v5lite" in kind:
        return 1 << 20
    return 2 << 20


def _pick_tiling(B, T, D, x_bytes, target_bytes, min_blocks=8):
    """Choose (bt, rows, G, tile_d, n_d).

    rows = bt*T is made a multiple of 8 when B allows it (full vregs), the
    block is sized to ~target_bytes of x, and the grid is forced to have at
    least `min_blocks` blocks (when the shape allows) so v7x's two TensorCores
    both get work and the DMA pipeline has something to double-buffer.
    """
    need = 8 // math.gcd(8, T)                 # smallest bt with rows % 8 == 0
    bt = need if B % need == 0 else 1
    rows = bt * T

    elems_budget = max(8 * 128, target_bytes // x_bytes)
    d128 = _cdiv(D, 128)
    lanes_full = d128 * 128
    lane_budget = max(128, ((elems_budget // rows) // 128) * 128)
    tile_d = min(lanes_full, lane_budget)

    # Small-D case: pack more batch elements per block to fill the byte budget
    # (amortizes per-grid-step overhead) without dropping below min_blocks.
    if tile_d == lanes_full:
        while (B % (bt * 2) == 0
               and (bt * 2) * T * tile_d <= elems_budget
               and B // (bt * 2) >= min_blocks):
            bt *= 2
            rows = bt * T

    G = B // bt
    tg = tile_d // 128
    n_d = _cdiv(d128, tg)
    if G * n_d < min_blocks:
        want_nd = min(d128, _cdiv(min_blocks, G))
        if want_nd > n_d:
            tg = _cdiv(d128, want_nd)
            tile_d = tg * 128
            n_d = _cdiv(d128, tg)
    return bt, rows, G, tile_d, n_d


def mpe_psn_forward(x, coef, threshold, seed=0, *, tau=0.25, uniforms=None,
                    spike_dtype=None):
    """Returns (o_t, mem_loss) matching MPE_PSN.forward.

    o_t is the module's return value; mem_loss is what the torch module stashes
    on self.mem_loss.  x: [B, T, *feature_dims]; coef: T values.

    spike_dtype: optional narrower dtype for o_t (spikes are exactly {0,1});
      e.g. jnp.bfloat16 halves the write traffic of this HBM-bound kernel.
    uniforms: optional array (x's shape, values in [0,1)) replacing the
      in-kernel hardware PRNG (deterministic testing / non-TPU backends).
    seed: vary per call/step -- the HW PRNG stream is (seed, block_id) only.
    """
    use_hw_prng = (uniforms is None) and (jax.default_backend() == "tpu")

    B, T = x.shape[0], x.shape[1]
    D = math.prod(x.shape[2:])
    spike_dtype = x.dtype if spike_dtype is None else jnp.dtype(spike_dtype)
    x_bytes = jnp.dtype(x.dtype).itemsize

    bt, rows, G, tile_d, n_d = _pick_tiling(B, T, D, x_bytes,
                                            _block_bytes_target())
    mask_lanes = (n_d * tile_d) != D

    # Pure reshapes only -- no padding, no extra HBM pass.
    xg = x.reshape(G, rows, D)

    coef_rows = jnp.tile(jnp.asarray(coef, jnp.float32).reshape(T, 1), (bt, 1))
    r = jnp.arange(rows) % T
    tau_mask = jnp.where(r == 0, 0.0, jnp.float32(tau)).reshape(rows, 1)
    thr = jnp.asarray(threshold, jnp.float32).reshape(1)

    blk_x = pl.BlockSpec((1, rows, tile_d), lambda g, d: (g, 0, d))
    blk_row = pl.BlockSpec((rows, 1), lambda g, d: (0, 0))
    smem = pl.BlockSpec(memory_space=pltpu.MemorySpace.SMEM)

    out_shape = [
        jax.ShapeDtypeStruct((G, rows, D), spike_dtype),       # o_t
        jax.ShapeDtypeStruct((G, n_d, 1, 1), jnp.float32),     # loss partials
    ]
    out_specs = [blk_x, pl.BlockSpec((1, 1, 1, 1), lambda g, d: (g, d, 0, 0))]

    if use_hw_prng:
        # TODO(synk): torch.bernoulli's exact RNG stream cannot be reproduced;
        # the TPU hardware PRNG is seeded per (call seed, block id).
        seed_arr = jnp.asarray(seed, jnp.int32).reshape(1)
        inputs = (seed_arr, thr, xg, tau_mask, coef_rows)
        in_specs = [smem, smem, blk_x, blk_row, blk_row]
    else:
        if uniforms is None:
            uniforms = jax.random.uniform(jax.random.PRNGKey(int(seed)),
                                          (B, T, D), dtype=jnp.float32)
        ug = jnp.asarray(uniforms, jnp.float32).reshape(G, rows, D)
        inputs = (thr, xg, ug, tau_mask, coef_rows)
        in_specs = [smem, blk_x, blk_x, blk_row, blk_row]

    kernel = functools.partial(
        _mpe_psn_kernel, use_hw_prng=use_hw_prng,
        use_roll=_roll_matches_np_roll(), d_total=D, tile_d=tile_d,
        mask_lanes=mask_lanes)

    # Raise the scoped-VMEM limit so the larger (2 MiB-class) double-buffered
    # blocks fit on every chip; clamp to the physical capacity when queryable.
    vmem_limit = 64 * 1024 * 1024
    try:
        vmem_limit = min(vmem_limit,
                         int(pltpu.get_tpu_info().vmem_capacity_bytes))
    except Exception:
        pass

    o_g, loss_parts = pl.pallas_call(
        kernel,
        grid=(G, n_d),
        in_specs=in_specs,
        out_specs=out_specs,
        out_shape=out_shape,
        compiler_params=pltpu.CompilerParams(
            dimension_semantics=("parallel", "parallel"),
            vmem_limit_bytes=vmem_limit),
    )(*inputs)

    o_t = o_g.reshape(x.shape)
    mem_loss = jnp.sum(loss_parts) / (B * T * D)
    return o_t, mem_loss


def _reference_forward(x, u, coef, threshold, tau):
    """Direct transcription of MPE_PSN.forward given explicit uniforms u."""
    x = x.astype(jnp.float32)
    sig = jax.nn.sigmoid(x)
    bern = (u < sig).astype(jnp.float32)
    mem_hat = (1.0 - bern) * x
    v0 = jnp.zeros_like(x[:, :1])
    mem_hat = jnp.concatenate([v0, mem_hat], axis=1)
    mem_memo = mem_hat[:, :-1] * tau + x
    o = (mem_memo - threshold > 0).astype(jnp.float32)
    mem_real = (1.0 - o) * mem_memo
    mem_loss = jnp.mean((mem_hat[:, 1:] - mem_real) ** 2 * coef)
    return o, mem_loss


if __name__ == "__main__":
    key = jax.random.PRNGKey(0)
    B, T, C, H, W = 2, 4, 4, 16, 16
    kx, ku = jax.random.split(key)
    x = jax.random.normal(kx, (B, T, C, H, W), dtype=jnp.float32)

    # Deterministic parameters, same as the module's __init__ defaults:
    threshold = jnp.float32(1.0)
    coef = jnp.full((1, T, 1, 1, 1), 1.0 / T, dtype=jnp.float32)

    # Main call: hardware PRNG + narrow (bf16) spike output to cut write BW.
    o_t, mem_loss = mpe_psn_forward(x, coef, threshold, seed=0, tau=0.25,
                                    spike_dtype=jnp.bfloat16)
    jax.block_until_ready((o_t, mem_loss))
    assert o_t.shape == x.shape and o_t.dtype == jnp.bfloat16
    assert bool(jnp.all((o_t == 0) | (o_t == 1)))           # spikes are {0, 1}
    assert bool(jnp.isfinite(mem_loss))

    # Self-check against a direct transcription of the PyTorch forward, using
    # explicit uniforms so both sides draw identical bernoulli samples (this
    # path keeps the default o_t dtype == x.dtype, like the torch module).
    u = jax.random.uniform(ku, x.shape, dtype=jnp.float32)
    o_k, loss_k = mpe_psn_forward(x, coef, threshold, tau=0.25, uniforms=u)
    o_r, loss_r = _reference_forward(x, u, coef, threshold, 0.25)
    jax.block_until_ready((o_k, loss_k))
    assert o_k.dtype == x.dtype
    mismatch = float(jnp.mean(jnp.abs(o_k.astype(jnp.float32) - o_r)))
    assert mismatch < 5e-3, f"spike mismatch fraction {mismatch}"
    lk, lr = float(loss_k), float(loss_r)
    assert abs(lk - lr) < 1e-2 * max(abs(lr), 1e-3) + 1e-4, (lk, lr)

    print("KERNEL_OK")
</pallas_src>

<mosaic_0001>
module attributes {stable_mosaic.version = 11 : i64} {
  func.func @probe(%arg0: memref<8x128xf32, #tpu.memory_space<vmem>>, %arg1: memref<8x128xf32, #tpu.memory_space<vmem>>) attributes {dimension_semantics = [], scalar_prefetch = 0 : i64, scratch_operands = 0 : i64, tpu.core_type = #tpu.core_type<tc>} {
    %c0 = arith.constant 0 : index
    %c0_0 = arith.constant 0 : index
    %0 = vector.load %arg0[%c0, %c0_0] : memref<8x128xf32, #tpu.memory_space<vmem>>, vector<8x128xf32>
    %c1_i32 = arith.constant 1 : i32
    %1 = tpu.dynamic_rotate %0 by %c1_i32 dim 0 : vector<8x128xf32>, i32 -> vector<8x128xf32>
    %c0_1 = arith.constant 0 : index
    %c0_2 = arith.constant 0 : index
    %2 = vector.load %arg1[%c0_1, %c0_2] : memref<8x128xf32, #tpu.memory_space<vmem>>, vector<8x128xf32>
    tpu.vector_store %arg1[%c0_1, %c0_2], %1 {strides = array<i32>} : memref<8x128xf32, #tpu.memory_space<vmem>>, vector<8x128xf32>,
    return
  }
}

module attributes {stable_mosaic.version = 11 : i64} {
  func.func @_mpe_psn_kernel(%arg0: i32, %arg1: i32, %arg2: memref<1xf32, #tpu.memory_space<smem>>, %arg3: memref<1x8x128xf32, #tpu.memory_space<vmem>>, %arg4: memref<1x8x128xf32, #tpu.memory_space<vmem>>, %arg5: memref<8x1xf32, #tpu.memory_space<vmem>>, %arg6: memref<8x1xf32, #tpu.memory_space<vmem>>, %arg7: memref<1x8x128xbf16, #tpu.memory_space<vmem>>, %arg8: memref<1x1x1x1xf32, #tpu.memory_space<vmem>>) attributes {dimension_semantics = [#tpu.dimension_semantics<parallel>, #tpu.dimension_semantics<parallel>], iteration_bounds = array<i64: 1, 8>, scalar_prefetch = 0 : i64, scratch_operands = 0 : i64, tpu.core_type = #tpu.core_type<tc>, window_params = [{transform_indices = @transform_0, window_bounds = array<i64: 1>}, {transform_indices = @transform_1, window_bounds = array<i64: 1, 8, 128>}, {transform_indices = @transform_2, window_bounds = array<i64: 1, 8, 128>}, {pipeline_mode = #tpu.pipeline_mode<synchronous>, transform_indices = @transform_3, window_bounds = array<i64: 8, 1>}, {pipeline_mode = #tpu.pipeline_mode<synchronous>, transform_indices = @transform_4, window_bounds = array<i64: 8, 1>}, {transform_indices = @transform_5, window_bounds = array<i64: 1, 8, 128>}, {transform_indices = @transform_6, window_bounds = array<i64: 1, 1, 1, 1>}]} {
    %c0 = arith.constant 0 : index
    %0 = memref.load %arg2[%c0] : memref<1xf32, #tpu.memory_space<smem>>
    %c0_0 = arith.constant 0 : index
    %c0_1 = arith.constant 0 : index
    %c0_2 = arith.constant 0 : index
    %1 = vector.load %arg3[%c0_0, %c0_1, %c0_2] : memref<1x8x128xf32, #tpu.memory_space<vmem>>, vector<1x8x128xf32>
    %2 = vector.shape_cast %1 : vector<1x8x128xf32> to vector<8x128xf32>
    %3 = arith.negf %2 : vector<8x128xf32>
    %4 = math.exp %3 : vector<8x128xf32>
    %cst = arith.constant 1.000000e+00 : f32
    %5 = vector.broadcast %cst : f32 to vector<8x128xf32>
    %6 = arith.addf %5, %4 : vector<8x128xf32>
    %7 = arith.divf %5, %6 : vector<8x128xf32>
    %c0_3 = arith.constant 0 : index
    %c0_4 = arith.constant 0 : index
    %c0_5 = arith.constant 0 : index
    %8 = vector.load %arg4[%c0_3, %c0_4, %c0_5] : memref<1x8x128xf32, #tpu.memory_space<vmem>>, vector<1x8x128xf32>
    %9 = vector.shape_cast %8 : vector<1x8x128xf32> to vector<8x128xf32>
    %10 = arith.cmpf olt, %9, %7 : vector<8x128xf32>
    %cst_6 = arith.constant 0.000000e+00 : f32
    %11 = vector.broadcast %cst_6 : f32 to vector<8x128xf32>
    %12 = arith.select %10, %11, %2 : vector<8x128xi1>, vector<8x128xf32>
    %cst_7 = arith.constant 0.000000e+00 : f32
    %13 = vector.broadcast %cst_7 : f32 to vector<1x128xf32>
    %14 = vector.extract_strided_slice %12 {offsets = [0, 0], sizes = [7, 128], strides = [1, 1]} : vector<8x128xf32> to vector<7x128xf32>
    %15 = tpu.concatenate %13, %14 in 0 : vector<1x128xf32>, vector<7x128xf32> -> vector<8x128xf32>
    %c0_8 = arith.constant 0 : index
    %c0_9 = arith.constant 0 : index
    %16 = vector.load %arg5[%c0_8, %c0_9] : memref<8x1xf32, #tpu.memory_space<vmem>>, vector<8x1xf32>
    %17 = vector.broadcast %16 : vector<8x1xf32> to vector<8x128xf32>
    %18 = arith.mulf %15, %17 : vector<8x128xf32>
    %19 = arith.addf %18, %2 : vector<8x128xf32>
    %20 = vector.broadcast %0 : f32 to vector<8x128xf32>
    %21 = arith.subf %19, %20 : vector<8x128xf32>
    %cst_10 = arith.constant 0.000000e+00 : f32
    %22 = vector.broadcast %cst_10 : f32 to vector<8x128xf32>
    %23 = arith.cmpf ogt, %21, %22 : vector<8x128xf32>
    %24 = arith.extui %23 : vector<8x128xi1> to vector<8x128xi32>
    %25 = arith.sitofp %24 : vector<8x128xi32> to vector<8x128xf32>
    %26 = arith.truncf %25 : vector<8x128xf32> to vector<8x128xbf16>
    %c0_11 = arith.constant 0 : index
    %c0_12 = arith.constant 0 : index
    %c0_13 = arith.constant 0 : index
    %27 = vector.load %arg7[%c0_11, %c0_12, %c0_13] : memref<1x8x128xbf16, #tpu.memory_space<vmem>>, vector<1x8x128xbf16>
    %28 = vector.shape_cast %27 : vector<1x8x128xbf16> to vector<8x128xbf16>
    %29 = vector.shape_cast %26 : vector<8x128xbf16> to vector<1x8x128xbf16>
    tpu.vector_store %arg7[%c0_11, %c0_12, %c0_13], %29 {strides = array<i32>} : memref<1x8x128xbf16, #tpu.memory_space<vmem>>, vector<1x8x128xbf16>,
    %30 = arith.subf %12, %19 : vector<8x128xf32>
    %31 = arith.select %23, %12, %30 : vector<8x128xi1>, vector<8x128xf32>
    %32 = arith.mulf %31, %31 : vector<8x128xf32>
    %cst_14 = arith.constant dense<0.000000e+00> : vector<8xf32>
    %33 = vector.multi_reduction <add>, %32, %cst_14 [1] : vector<8x128xf32> to vector<8xf32>
    %34 = vector.shape_cast %33 : vector<8xf32> to vector<8x1xf32>
    %c0_15 = arith.constant 0 : index
    %c0_16 = arith.constant 0 : index
    %35 = vector.load %arg6[%c0_15, %c0_16] : memref<8x1xf32, #tpu.memory_space<vmem>>, vector<8x1xf32>
    %36 = arith.mulf %34, %35 : vector<8x1xf32>
    %cst_17 = arith.constant dense<0.000000e+00> : vector<1xf32>
    %37 = vector.multi_reduction <add>, %36, %cst_17 [0] : vector<8x1xf32> to vector<1xf32>
    %38 = vector.shape_cast %37 : vector<1xf32> to vector<1x1xf32>
    %c0_18 = arith.constant 0 : index
    %c0_19 = arith.constant 0 : index
    %c0_20 = arith.constant 0 : index
    %c0_21 = arith.constant 0 : index
    %39 = vector.load %arg8[%c0_18, %c0_19, %c0_20, %c0_21] : memref<1x1x1x1xf32, #tpu.memory_space<vmem>>, vector<1x1x1x1xf32>
    %40 = vector.shape_cast %39 : vector<1x1x1x1xf32> to vector<1x1xf32>
    %41 = vector.shape_cast %38 : vector<1x1xf32> to vector<1x1x1x1xf32>
    tpu.vector_store %arg8[%c0_18, %c0_19, %c0_20, %c0_21], %41 {strides = array<i32>} : memref<1x1x1x1xf32, #tpu.memory_space<vmem>>, vector<1x1x1x1xf32>,
    return
  }
  func.func @transform_0(%arg0: i32, %arg1: i32) -> i32 {
    %c0_i32 = arith.constant 0 : i32
    %c0_i32_0 = arith.constant 0 : i32
    return %c0_i32 : i32
  }
  func.func @transform_1(%arg0: i32, %arg1: i32) -> (i32, i32, i32) {
    %c0_i32 = arith.constant 0 : i32
    %c0_i32_0 = arith.constant 0 : i32
    return %arg0, %c0_i32, %arg1 : i32, i32, i32
  }
  func.func @transform_2(%arg0: i32, %arg1: i32) -> (i32, i32, i32) {
    %c0_i32 = arith.constant 0 : i32
    %c0_i32_0 = arith.constant 0 : i32
    return %arg0, %c0_i32, %arg1 : i32, i32, i32
  }
  func.func @transform_3(%arg0: i32, %arg1: i32) -> (i32, i32) {
    %c0_i32 = arith.constant 0 : i32
    %c0_i32_0 = arith.constant 0 : i32
    %c0_i32_1 = arith.constant 0 : i32
    return %c0_i32, %c0_i32_0 : i32, i32
  }
  func.func @transform_4(%arg0: i32, %arg1: i32) -> (i32, i32) {
    %c0_i32 = arith.constant 0 : i32
    %c0_i32_0 = arith.constant 0 : i32
    %c0_i32_1 = arith.constant 0 : i32
    return %c0_i32, %c0_i32_0 : i32, i32
  }
  func.func @transform_5(%arg0: i32, %arg1: i32) -> (i32, i32, i32) {
    %c0_i32 = arith.constant 0 : i32
    %c0_i32_0 = arith.constant 0 : i32
    return %arg0, %c0_i32, %arg1 : i32, i32, i32
  }
  func.func @transform_6(%arg0: i32, %arg1: i32) -> (i32, i32, i32, i32) {
    %c0_i32 = arith.constant 0 : i32
    %c0_i32_0 = arith.constant 0 : i32
    %c0_i32_1 = arith.constant 0 : i32
    return %arg0, %arg1, %c0_i32, %c0_i32_0 : i32, i32, i32, i32
  }
}

</mosaic_0001>

<llo_original>
// kernel: tpu_custom_call.1
$region0: #{tpu_custom_call.1}
  #allocation0 [shape = 'u32[]', space=smem, size = 0x4, offset = 0x4, fixed_abs, tag = 'smem constant byte address 0x4 - core index']
  #allocation1 [shape = 'u32[144,128]{1,0:T(1,128)}', space=vmem, size = 0x12000, scoped, tag = 'internal scratch']
  %s0 = inlined_call_operand.hbm [shape: f32[8,128], index: 0, kind: input, shape index: {}]
  %s1 = inlined_call_operand.hbm [shape: f32[8,128], index: 1, kind: output, shape index: {}]
  %s2 = sld [smem:[#allocation0]]
  $region18: #{tpu_custom_call.1} parent=0
    _
  %s4 = ssub.s32 1, %s2
  %s5 = scalar_select 0, %s4, %s2
  $region1: #{tpu_custom_call.1} parent=0
    #allocation2 [shape = 'u8[4096]{0}', space=vmem, size = 0x1000, scoped, tag = 'input window, operand 0, single buffered']
    #allocation3 [shape = 's32[1]{0}', space=sflag, size = 0x4, scoped, tag = 'scoped memory for tpu_custom_call.1']
    #allocation4 [shape = 's32[1]{0}', space=sflag, size = 0x4, scoped, tag = 'scoped memory for tpu_custom_call.1']
    #allocation5 [shape = 'u8[4096]{0}', space=vmem, size = 0x1000, scoped, tag = 'output window, operand 0, single buffered']
    %6 = vsyncpa [#allocation3], 0
    %7 = vsyncpa [#allocation4], 0
    // Predicated region
    $region2: #{tpu_custom_call.1} parent=1 // pred_check
      _
    $region3: #{tpu_custom_call.1} parent=1 // pred_check_branch
      %9 = sbr.rel (0) target = $region5
    $region4: #{tpu_custom_call.1} parent=1 // pred_region
      %s11 = ssub.s32 128, 128
      %12 = vsyncadd [#allocation3], %s11
      %s14 = sshll.u32 [#allocation2], 4
      %s15 = int_to_ptr.vmem [resolvable:$true] %s14
      %17 = dma.hbm_to_vmem [thread:$0]  %s0, 128, %s15, [#allocation3]
    $region5: #{tpu_custom_call.1} parent=1 // pred_fallthru
      _
    // Predicated region
    $region6: #{tpu_custom_call.1} parent=1 // pred_check
      _
    $region7: #{tpu_custom_call.1} parent=1 // pred_check_branch
      %19 = sbr.rel (0) target = $region9
    $region8: #{tpu_custom_call.1} parent=1 // pred_region
      %20 = dma.done [#allocation3], 128
    $region9: #{tpu_custom_call.1} parent=1 // pred_fallthru
      _
    %v21 = vld [vmem:[#allocation2] sm:$0xff]
    %v22 = vrot.slane %v21, 7
    %23 = vst [vmem:[#allocation5] sm:$0xff] %v22
    // Predicated region
    $region10: #{tpu_custom_call.1} parent=1 // pred_check
      _
    $region11: #{tpu_custom_call.1} parent=1 // pred_check_branch
      %25 = sbr.rel (0) target = $region13
    $region12: #{tpu_custom_call.1} parent=1 // pred_region
      %s27 = ssub.s32 128, 128
      %28 = vsyncadd [#allocation4], %s27
      %s30 = sshll.u32 [#allocation5], 4
      %s31 = int_to_ptr.vmem [resolvable:$true] %s30
      %33 = dma.vmem_to_hbm [thread:$0]  %s31, 128, %s1, [#allocation4]
    $region13: #{tpu_custom_call.1} parent=1 // pred_fallthru
      _
    // Predicated region
    $region14: #{tpu_custom_call.1} parent=1 // pred_check
      _
    $region15: #{tpu_custom_call.1} parent=1 // pred_check_branch
      %35 = sbr.rel (0) target = $region17
    $region16: #{tpu_custom_call.1} parent=1 // pred_region
      %36 = dma.done [#allocation4], 128
    $region17: #{tpu_custom_call.1} parent=1 // pred_fallthru
      _
    %37 = vsyncpa [#allocation3], 1
    %38 = vsyncpa [#allocation4], 1

// kernel: tpu_custom_call.1
$region0: #{tpu_custom_call.1}
  #allocation0 [shape = 'u32[]', space=smem, size = 0x4, offset = 0x4, fixed_abs, tag = 'smem constant byte address 0x4 - core index']
  #allocation1 [shape = 'u32[144,128]{1,0:T(1,128)}', space=vmem, size = 0x12000, scoped, tag = 'internal scratch']
  #allocation2 [shape = 'f32[1]{0:T(128)S(6)}', space=smem, size = 0x200, scoped, tag = 'scoped memory for tpu_custom_call.1']
  %s0 = inlined_call_operand.<no memory space> [shape: f32[1], index: 0, kind: input, shape index: {}]
  %s1 = inlined_call_operand.hbm [shape: f32[1,8,1024], index: 1, kind: input, shape index: {}]
  %s2 = inlined_call_operand.hbm [shape: f32[1,8,1024], index: 2, kind: input, shape index: {}]
  %s3 = inlined_call_operand.vmem [shape: f32[8,1], index: 3, kind: input, shape index: {}]
  %s4 = inlined_call_operand.vmem [shape: f32[8,1], index: 4, kind: input, shape index: {}]
  %s5 = inlined_call_operand.hbm [shape: bf16[1,8,1024], index: 5, kind: output, shape index: {0}]
  %s6 = inlined_call_operand.vmem [shape: f32[1,8,1,1], index: 6, kind: output, shape index: {1}]
  %7 = xla_tuple %s5, %s6
  %s8 = sld [smem:[#allocation0]]
  $region69: #{tpu_custom_call.1} parent=0
    _
  %s10 = ssub.s32 1, %s8
  %s11 = scalar_select 0, %s10, %s8
  %12 = sst [smem:[#allocation2]] %s0
  $region1: #{tpu_custom_call.1} parent=0
    #allocation3 [shape = 'u8[8192]{0}', space=vmem, size = 0x2000, scoped, tag = 'input window, operand 1']
    #allocation4 [shape = 's32[2]{0}', space=sflag, size = 0x8, scoped, tag = 'scoped memory for tpu_custom_call.1']
    #allocation5 [shape = 's32[2]{0}', space=sflag, size = 0x8, scoped, tag = 'scoped memory for tpu_custom_call.1']
    #allocation6 [shape = 'u8[8192]{0}', space=vmem, size = 0x2000, scoped, tag = 'input window, operand 2']
    #allocation7 [shape = 's32[2]{0}', space=sflag, size = 0x8, scoped, tag = 'scoped memory for tpu_custom_call.1']
    #allocation8 [shape = 'u8[4096]{0}', space=vmem, size = 0x1000, scoped, tag = 'output window, operand 0']
    %13 = vsyncpa [#allocation4], 0
    %s14 = scalar_lea.sflag [#allocation4], 1
    %15 = vsyncpa %s14, 0
    %16 = vsyncpa [#allocation7], 0
    %s17 = scalar_lea.sflag [#allocation7], 1
    %18 = vsyncpa %s17, 0
    %19 = vsyncpa [#allocation5], 0
    %s20 = scalar_lea.sflag [#allocation5], 1
    %21 = vsyncpa %s20, 0
    loop: start=0, step=1, limit=10
    $region2: #{tpu_custom_call.1} parent=1 // loop_pre_header
      _
    $region3: #{tpu_custom_call.1} parent=1 // loop_header
      %s23 = sphi 0, %s27
      %p24 = scmp.ge.s32.totalorder %s23, 10
      %s30 = sphi 0, %s42
      %s31 = sphi 0, %s38
      %s32 = sphi 0, %s30
      %s33 = sphi 0, %s31
      %s34 = sphi 0, %s32
      %s35 = sphi 0, %s33
      %s43 = sphi 0, %s43
      %s45 = sphi 0, %s43
      %s46 = sphi 0, %s45
      %s60 = sphi 0, %s46
      %s68 = sphi 0, %s70
      %s71 = sphi 0, %s68
      %s72 = sphi 0, %s71
      %s88 = sphi 0, %s72
      %s96 = sphi 0, %s98
      %s99 = sphi 0, %s96
      %s100 = sphi 0, %s99
      %s116 = sphi 0, %s100
      %s120 = sphi 0, %s120
      %s122 = sphi 0, %s120
      %s123 = sphi 0, %s122
      %s137 = sphi 0, %s123
      %s141 = sphi 0, %s141
      %s143 = sphi 0, %s141
      %s144 = sphi 0, %s143
      %s158 = sphi 0, %s144
      %s166 = sphi 0, %s168
      %s169 = sphi 0, %s166
      %s170 = sphi 0, %s169
      %s186 = sphi 0, %s170
      %s194 = sphi 0, %s196
      %s197 = sphi 0, %s194
      %s198 = sphi 0, %s197
      %s214 = sphi 0, %s198
    $region4: #{tpu_custom_call.1} parent=1 // loop_header_branch
      %26 = sbr.rel (%p24) target = $region8
    $region5: #{tpu_custom_call.1} parent=1 // loop_body
      %s28 = ssub.s32 %s23, 1
      %s29 = ssub.s32 %s23, 2
      %s36 = sadd.s32 1, %s31
      %p37 = scmp.ge.s32.totalorder %s36, 8
      %s38 = scalar_select %p37, 0, %s36
      %s39 = sadd.s32 1, %s30
      %s40 = scalar_select %p37, %s39, %s30
      %p41 = scmp.ge.s32.totalorder %s40, 1
      %s42 = scalar_select %p41, 0, %s40
      %s44 = sadd.s32 %s43, 1
      %p47 = scmp.eq.s32.totalorder %s23, 7
      %p48 = scmp.ne.s32.totalorder %s43, %s45
      %p49 = scmp.eq.s32.totalorder %s23, 0
      %p50 = por %p48, %p49
      %p51 = scmp.ne.s32.totalorder %s43, %s45
      %p52 = scmp.eq.s32.totalorder %s28, 7
      %p53 = por %p51, %p52
      %p54 = scmp.ne.s32.totalorder %s45, %s46
      %p55 = scmp.eq.s32.totalorder %s28, 0
      %p56 = por %p54, %p55
      %p57 = scmp.ne.s32.totalorder %s45, %s46
      %p58 = scmp.eq.s32.totalorder %s29, 7
      %p59 = por %p57, %p58
      %p61 = scmp.ne.s32.totalorder %s46, %s60
      %p62 = scmp.eq.s32.totalorder %s29, 0
      %p63 = por %p61, %p62
      %s64 = ssub.s32 %s30, %s42
      %s65 = ssub.s32 %s31, %s38
      %s66 = sor.u32 %s64, %s65
      %p67 = scmp.eq.s32.totalorder %s66, 0
      %s69 = sadd.s32 %s68, 1
      %s70 = scalar_select %p67, %s68, %s69
      %p73 = pneg %p67
      %p74 = scmp.eq.s32.totalorder %s23, 7
      %p75 = por %p73, %p74
      %p76 = scmp.ne.s32.totalorder %s68, %s71
      %p77 = scmp.eq.s32.totalorder %s23, 0
      %p78 = por %p76, %p77
      %p79 = scmp.ne.s32.totalorder %s68, %s71
      %p80 = scmp.eq.s32.totalorder %s28, 7
      %p81 = por %p79, %p80
      %p82 = scmp.ne.s32.totalorder %s71, %s72
      %p83 = scmp.eq.s32.totalorder %s28, 0
      %p84 = por %p82, %p83
      %p85 = scmp.ne.s32.totalorder %s71, %s72
      %p86 = scmp.eq.s32.totalorder %s29, 7
      %p87 = por %p85, %p86
      %p89 = scmp.ne.s32.totalorder %s72, %s88
      %p90 = scmp.eq.s32.totalorder %s29, 0
      %p91 = por %p89, %p90
      %s92 = ssub.s32 %s30, %s42
      %s93 = ssub.s32 %s31, %s38
      %s94 = sor.u32 %s92, %s93
      %p95 = scmp.eq.s32.totalorder %s94, 0
      %s97 = sadd.s32 %s96, 1
      %s98 = scalar_select %p95, %s96, %s97
      %p101 = pneg %p95
      %p102 = scmp.eq.s32.totalorder %s23, 7
      %p103 = por %p101, %p102
      %p104 = scmp.ne.s32.totalorder %s96, %s99
      %p105 = scmp.eq.s32.totalorder %s23, 0
      %p106 = por %p104, %p105
      %p107 = scmp.ne.s32.totalorder %s96, %s99
      %p108 = scmp.eq.s32.totalorder %s28, 7
      %p109 = por %p107, %p108
      %p110 = scmp.ne.s32.totalorder %s99, %s100
      %p111 = scmp.eq.s32.totalorder %s28, 0
      %p112 = por %p110, %p111
      %p113 = scmp.ne.s32.totalorder %s99, %s100
      %p114 = scmp.eq.s32.totalorder %s29, 7
      %p115 = por %p113, %p114
      %p117 = scmp.ne.s32.totalorder %s100, %s116
      %p118 = scmp.eq.s32.totalorder %s29, 0
      %p119 = por %p117, %p118
      %s121 = sadd.s32 %s120, 1
      %p124 = scmp.eq.s32.totalorder %s23, 7
      %p125 = scmp.ne.s32.totalorder %s120, %s122
      %p126 = scmp.eq.s32.totalorder %s23, 0
      %p127 = por %p125, %p126
      %p128 = scmp.ne.s32.totalorder %s120, %s122
      %p129 = scmp.eq.s32.totalorder %s28, 7
      %p130 = por %p128, %p129
      %p131 = scmp.ne.s32.totalorder %s122, %s123
      %p132 = scmp.eq.s32.totalorder %s28, 0
      %p133 = por %p131, %p132
      %p134 = scmp.ne.s32.totalorder %s122, %s123
      %p135 = scmp.eq.s32.totalorder %s29, 7
      %p136 = por %p134, %p135
      %p138 = scmp.ne.s32.totalorder %s123, %s137
      %p139 = scmp.eq.s32.totalorder %s29, 0
      %p140 = por %p138, %p139
      %s142 = sadd.s32 %s141, 1
      %p145 = scmp.eq.s32.totalorder %s23, 7
      %p146 = scmp.ne.s32.totalorder %s141, %s143
      %p147 = scmp.eq.s32.totalorder %s23, 0
      %p148 = por %p146, %p147
      %p149 = scmp.ne.s32.totalorder %s141, %s143
      %p150 = scmp.eq.s32.totalorder %s28, 7
      %p151 = por %p149, %p150
      %p152 = scmp.ne.s32.totalorder %s143, %s144
      %p153 = scmp.eq.s32.totalorder %s28, 0
      %p154 = por %p152, %p153
      %p155 = scmp.ne.s32.totalorder %s143, %s144
      %p156 = scmp.eq.s32.totalorder %s29, 7
      %p157 = por %p155, %p156
      %p159 = scmp.ne.s32.totalorder %s144, %s158
      %p160 = scmp.eq.s32.totalorder %s29, 0
      %p161 = por %p159, %p160
      %s162 = ssub.s32 %s30, %s42
      %s163 = ssub.s32 %s31, %s38
      %s164 = sor.u32 %s162, %s163
      %p165 = scmp.eq.s32.totalorder %s164, 0
      %s167 = sadd.s32 %s166, 1
      %s168 = scalar_select %p165, %s166, %s167
      %p171 = pneg %p165
      %p172 = scmp.eq.s32.totalorder %s23, 7
      %p173 = por %p171, %p172
      %p174 = scmp.ne.s32.totalorder %s166, %s169
      %p175 = scmp.eq.s32.totalorder %s23, 0
      %p176 = por %p174, %p175
      %p177 = scmp.ne.s32.totalorder %s166, %s169
      %p178 = scmp.eq.s32.totalorder %s28, 7
      %p179 = por %p177, %p178
      %p180 = scmp.ne.s32.totalorder %s169, %s170
      %p181 = scmp.eq.s32.totalorder %s28, 0
      %p182 = por %p180, %p181
      %p183 = scmp.ne.s32.totalorder %s169, %s170
      %p184 = scmp.eq.s32.totalorder %s29, 7
      %p185 = por %p183, %p184
      %p187 = scmp.ne.s32.totalorder %s170, %s186
      %p188 = scmp.eq.s32.totalorder %s29, 0
      %p189 = por %p187, %p188
      %s190 = ssub.s32 %s30, %s42
      %s191 = ssub.s32 %s31, %s38
      %s192 = sor.u32 %s190, %s191
      %p193 = scmp.eq.s32.totalorder %s192, 0
      %s195 = sadd.s32 %s194, 1
      %s196 = scalar_select %p193, %s194, %s195
      %p199 = pneg %p193
      %p200 = scmp.eq.s32.totalorder %s23, 7
      %p201 = por %p199, %p200
      %p202 = scmp.ne.s32.totalorder %s194, %s197
      %p203 = scmp.eq.s32.totalorder %s23, 0
      %p204 = por %p202, %p203
      %p205 = scmp.ne.s32.totalorder %s194, %s197
      %p206 = scmp.eq.s32.totalorder %s28, 7
      %p207 = por %p205, %p206
      %p208 = scmp.ne.s32.totalorder %s197, %s198
      %p209 = scmp.eq.s32.totalorder %s28, 0
      %p210 = por %p208, %p209
      %p211 = scmp.ne.s32.totalorder %s197, %s198
      %p212 = scmp.eq.s32.totalorder %s29, 7
      %p213 = por %p211, %p212
      %p215 = scmp.ne.s32.totalorder %s198, %s214
      %p216 = scmp.eq.s32.totalorder %s29, 0
      %p217 = por %p215, %p216
      %p218 = scmp.le.s32.totalorder 1, %s23
      %p219 = scmp.lt.s32.totalorder %s23, 9
      %p220 = pnand %p218, %p219
      %p221 = pneg %p220
      // Predicated region
      $region9: #{tpu_custom_call.1} parent=5 // pred_check
        _
      $region10: #{tpu_custom_call.1} parent=5 // pred_check_branch
        %223 = sbr.rel (%p220) target = $region12
      $region11: #{tpu_custom_call.1} parent=5 // pred_region
        %s224 = ssub.s32 %s23, 1
        // Predicated region
        $region13: #{tpu_custom_call.1} parent=11 // pred_check
          %p225 = pneg %p56
        $region14: #{tpu_custom_call.1} parent=11 // pred_check_branch
          %227 = sbr.rel (%p225) target = $region16
        $region15: #{tpu_custom_call.1} parent=11 // pred_region
          _
        $region16: #{tpu_custom_call.1} parent=11 // pred_fallthru
          _
        // Predicated region
        $region17: #{tpu_custom_call.1} parent=11 // pred_check
          %p228 = pneg %p133
        $region18: #{tpu_custom_call.1} parent=11 // pred_check_branch
          %230 = sbr.rel (%p228) target = $region20
        $region19: #{tpu_custom_call.1} parent=11 // pred_region
          _
        $region20: #{tpu_custom_call.1} parent=11 // pred_fallthru
          _
        // Predicated region
        $region21: #{tpu_custom_call.1} parent=11 // pred_check
          %p231 = pneg %p154
        $region22: #{tpu_custom_call.1} parent=11 // pred_check_branch
          %233 = sbr.rel (%p231) target = $region24
        $region23: #{tpu_custom_call.1} parent=11 // pred_region
          _
        $region24: #{tpu_custom_call.1} parent=11 // pred_fallthru
          _
      $region12: #{tpu_custom_call.1} parent=5 // pred_fallthru
        _
      %p234 = scmp.lt.s32.totalorder %s23, 8
      // Predicated region
      $region25: #{tpu_custom_call.1} parent=5 // pred_check
        %p235 = pneg %p234
      $region26: #{tpu_custom_call.1} parent=5 // pred_check_branch
        %237 = sbr.rel (%p235) target = $region28
      $region27: #{tpu_custom_call.1} parent=5 // pred_region
        // Predicated region
        $region29: #{tpu_custom_call.1} parent=27 // pred_check
          %p238 = pneg %p78
        $region30: #{tpu_custom_call.1} parent=27 // pred_check_branch
          %240 = sbr.rel (%p238) target = $region32
        $region31: #{tpu_custom_call.1} parent=27 // pred_region
          %s241 = sand.u32 %s68, 1
          %s242 = scalar_lea.sflag [#allocation4], %s241
          %s243 = sand.u32 %s68, 1
          %s244 = smul.addr %s243, 8
          %s245 = scalar_lea.vmem [#allocation3], %s244
          %s247 = ssub.s32 128, 128
          %248 = vsyncadd %s242, %s247
          %s249 = smul.addr %s30, 8
          %s250 = sadd.s32 %s31, %s249
          %s251 = smul.addr %s250, 128
          %s252 = scalar_lea.hbm %s1, %s251
          %s254 = sshll.u32 %s245, 4
          %s255 = int_to_ptr.vmem [resolvable:$true] %s254
          %257 = dma.hbm_to_vmem [thread:$0]  %s252, 128, %s255, %s242
        $region32: #{tpu_custom_call.1} parent=27 // pred_fallthru
          _
        // Predicated region
        $region33: #{tpu_custom_call.1} parent=27 // pred_check
          %p258 = pneg %p106
        $region34: #{tpu_custom_call.1} parent=27 // pred_check_branch
          %260 = sbr.rel (%p258) target = $region36
        $region35: #{tpu_custom_call.1} parent=27 // pred_region
          %s261 = sand.u32 %s96, 1
          %s262 = scalar_lea.sflag [#allocation7], %s261
          %s263 = sand.u32 %s96, 1
          %s264 = smul.addr %s263, 8
          %s265 = scalar_lea.vmem [#allocation6], %s264
          %s267 = ssub.s32 128, 128
          %268 = vsyncadd %s262, %s267
          %s269 = smul.addr %s30, 8
          %s270 = sadd.s32 %s31, %s269
          %s271 = smul.addr %s270, 128
          %s272 = scalar_lea.hbm %s2, %s271
          %s274 = sshll.u32 %s265, 4
          %s275 = int_to_ptr.vmem [resolvable:$true] %s274
          %277 = dma.hbm_to_vmem [thread:$0]  %s272, 128, %s275, %s262
        $region36: #{tpu_custom_call.1} parent=27 // pred_fallthru
          _
      $region28: #{tpu_custom_call.1} parent=5 // pred_fallthru
        _
      %p278 = scmp.le.s32.totalorder 1, %s23
      %p279 = scmp.lt.s32.totalorder %s23, 9
      %p280 = pnand %p278, %p279
      %p281 = pneg %p280
      // Predicated region
      $region37: #{tpu_custom_call.1} parent=5 // pred_check
        _
      $region38: #{tpu_custom_call.1} parent=5 // pred_check_branch
        %283 = sbr.rel (%p280) target = $region40
      $region39: #{tpu_custom_call.1} parent=5 // pred_region
        %s284 = ssub.s32 %s23, 1
        %s285 = sand.u32 %s71, 1
        %s286 = scalar_lea.sflag [#allocation4], %s285
        %s287 = sand.u32 %s71, 1
        %s288 = smul.addr %s287, 8
        %s289 = scalar_lea.vmem [#allocation3], %s288
        // Predicated region
        $region41: #{tpu_custom_call.1} parent=39 // pred_check
          %p290 = pneg %p84
        $region42: #{tpu_custom_call.1} parent=39 // pred_check_branch
          %292 = sbr.rel (%p290) target = $region44
        $region43: #{tpu_custom_call.1} parent=39 // pred_region
          %293 = dma.done %s286, 128
        $region44: #{tpu_custom_call.1} parent=39 // pred_fallthru
          _
        %s294 = sand.u32 %s99, 1
        %s295 = scalar_lea.sflag [#allocation7], %s294
        %s296 = sand.u32 %s99, 1
        %s297 = smul.addr %s296, 8
        %s298 = scalar_lea.vmem [#allocation6], %s297
        // Predicated region
        $region45: #{tpu_custom_call.1} parent=39 // pred_check
          %p299 = pneg %p112
        $region46: #{tpu_custom_call.1} parent=39 // pred_check_branch
          %301 = sbr.rel (%p299) target = $region48
        $region47: #{tpu_custom_call.1} parent=39 // pred_region
          %302 = dma.done %s295, 128
        $region48: #{tpu_custom_call.1} parent=39 // pred_fallthru
          _
        %p303 = pneg %p56
        %p304 = pneg %p53
        %s305 = sand.u32 %s71, 1
        %s306 = scalar_lea.sflag [#allocation4], %s305
        %s307 = sand.u32 %s71, 1
        %s308 = smul.addr %s307, 8
        %s309 = scalar_lea.vmem [#allocation3], %s308
        %p310 = pneg %p84
        %p311 = pneg %p81
        %s312 = sand.u32 %s99, 1
        %s313 = scalar_lea.sflag [#allocation7], %s312
        %s314 = sand.u32 %s99, 1
        %s315 = smul.addr %s314, 8
        %s316 = scalar_lea.vmem [#allocation6], %s315
        %p317 = pneg %p112
        %p318 = pneg %p109
        %p319 = pneg %p133
        %p320 = pneg %p130
        %p321 = pneg %p154
        %p322 = pneg %p151
        %p323 = pneg %p182
        %p324 = pneg %p179
        %s325 = sand.u32 %s169, 1
        %s326 = scalar_lea.sflag [#allocation5], %s325
        %s327 = sand.u32 %s169, 1
        %s328 = smul.addr %s327, 4
        %s329 = scalar_lea.vmem [#allocation8], %s328
        %p330 = pneg %p210
        %p331 = pneg %p207
        %p332 = scmp.lt.s32.totalorder %s32, 0
        %s333 = scalar_select %p332, %s32, 0
        %p334 = scmp.lt.s32.totalorder %s33, 7
        %s335 = scalar_select %p334, %s33, 7
        %s336 = smul.addr %s333, 8
        %s337 = sadd.s32 %s335, %s336
        %s338 = scalar_lea.vmem %s6, %s337
        %p339 = scmp.lt.s32.totalorder %s32, 0
        %s340 = scalar_select %p339, %s32, 0
        %p341 = scmp.lt.s32.totalorder %s33, 7
        %s342 = scalar_select %p341, %s33, 7
        %s343 = smul.addr %s340, 8
        %s344 = sadd.s32 %s342, %s343
        %s345 = scalar_lea.vmem %s6, %s344
        %s346 = sld [smem:[#allocation2]]
        %v347 = vld [vmem:[%s289] sm:$0xff]
        %v348 = vxor.u32 %v347, 2147483648
        %v349 = vmul.f32 %v348, 1.442695
        %v350 = vpow.pop %v349
        %v351 = vadd.f32 %v350, 1.0
        %v352 = vrcp.pop %v351
        %v353 = vmul.f32 1.0, %v352
        %v354 = vld [vmem:[%s298] sm:$0xff]
        %vm355 = vcmp.lt.f32.partialorder %v354, %v353
        %v356 = vsel %vm355, 0.0, %v347
        %v358 = vrot.slane %v356, 7
        %vm360 = vcmask 1040384
        %v361 = vsel %vm360, 0.0, %v358
        %v362 = vld [vmem:[%s3] sm:$0xff]
        %364 = vset.pattern.permute.xlu0 0
        %365 = vperm.xlu0 %364, %v362
        %v366 = vpop.permute.xlu0 %365
        %v368 = vmul.f32 %v361, %v366
        %v369 = vadd.f32 %v368, %v347
        %v370 = vstv %s346
        %v371 = vsub.f32 %v369, %v370
        %vm372 = vcmp.gt.f32.partialorder %v371, 0.0
        %v373 = vsel %vm372, 1, 0
        %v374 = vcvt.s32.f32 %v373
        %v375 = vpack.c.bf16 %v374, %v374
        %376 = vst [vmem:[%s329] sm:$0xf] %v375
        %v377 = vsub.f32 %v356, %v369
        %v378 = vsel %vm372, %v356, %v377
        %v379 = vmul.f32 %v378, %v378
        %380 = vadd.xlane.f32.xlu0 %v379
        %v381 = vpop.xlane.xlu0 %380
        %v382 = vld [vmem:[%s4] sm:$0xff]
        %v383 = vmul.f32 %v381, %v382
        %vm384 = vcmask 7168
        %v385 = vsel %vm384, %v383, 0.0
        %v386 = vrot.slane %v385, 4
        %v387 = vadd.f32 %v385, %v386
        %v388 = vrot.slane %v387, 2
        %v389 = vadd.f32 %v387, %v388
        %v390 = vrot.slane %v389, 1
        %v391 = vadd.f32 %v389, %v390
        %vm392 = vcmask 0
        %393 = vst.msk [vmem:[%s345] sm:$0x1] %vm392, %v391
        %s394 = sand.u32 %s169, 1
        %s395 = scalar_lea.sflag [#allocation5], %s394
        %s396 = sand.u32 %s169, 1
        %s397 = smul.addr %s396, 4
        %s398 = scalar_lea.vmem [#allocation8], %s397
        %p399 = scmp.lt.s32.totalorder %s32, 0
        %s400 = scalar_select %p399, %s32, 0
        %p401 = scmp.lt.s32.totalorder %s33, 7
        %s402 = scalar_select %p401, %s33, 7
        %s403 = smul.addr %s400, 8
        %s404 = sadd.s32 %s402, %s403
        %s405 = scalar_lea.vmem %s6, %s404
        // Predicated region
        $region49: #{tpu_custom_call.1} parent=39 // pred_check
          %p406 = pneg %p179
        $region50: #{tpu_custom_call.1} parent=39 // pred_check_branch
          %408 = sbr.rel (%p406) target = $region52
        $region51: #{tpu_custom_call.1} parent=39 // pred_region
          %s410 = ssub.s32 64, 64
          %411 = vsyncadd %s395, %s410
          %s412 = smul.addr %s32, 8
          %s413 = sadd.s32 %s33, %s412
          %s414 = smul.addr %s413, 64
          %s415 = scalar_lea.hbm %s5, %s414
          %s417 = sshll.u32 %s398, 4
          %s418 = int_to_ptr.vmem [resolvable:$true] %s417
          %420 = dma.vmem_to_hbm [thread:$0]  %s418, 64, %s415, %s395
        $region52: #{tpu_custom_call.1} parent=39 // pred_fallthru
          _
        // Predicated region
        $region53: #{tpu_custom_call.1} parent=39 // pred_check
          %p421 = pneg %p207
        $region54: #{tpu_custom_call.1} parent=39 // pred_check_branch
          %423 = sbr.rel (%p421) target = $region56
        $region55: #{tpu_custom_call.1} parent=39 // pred_region
          _
        $region56: #{tpu_custom_call.1} parent=39 // pred_fallthru
          _
      $region40: #{tpu_custom_call.1} parent=5 // pred_fallthru
        _
      %p424 = scmp.le.s32.totalorder 2, %s23
      // Predicated region
      $region57: #{tpu_custom_call.1} parent=5 // pred_check
        %p425 = pneg %p424
      $region58: #{tpu_custom_call.1} parent=5 // pred_check_branch
        %427 = sbr.rel (%p425) target = $region60
      $region59: #{tpu_custom_call.1} parent=5 // pred_region
        %s428 = ssub.s32 %s23, 2
        // Predicated region
        $region61: #{tpu_custom_call.1} parent=59 // pred_check
          %p429 = pneg %p185
        $region62: #{tpu_custom_call.1} parent=59 // pred_check_branch
          %431 = sbr.rel (%p429) target = $region64
        $region63: #{tpu_custom_call.1} parent=59 // pred_region
          %s432 = sand.u32 %s170, 1
          %s433 = scalar_lea.sflag [#allocation5], %s432
          %s434 = sand.u32 %s170, 1
          %s435 = smul.addr %s434, 4
          %s436 = scalar_lea.vmem [#allocation8], %s435
          %437 = dma.done %s433, 64
        $region64: #{tpu_custom_call.1} parent=59 // pred_fallthru
          _
        // Predicated region
        $region65: #{tpu_custom_call.1} parent=59 // pred_check
          %p438 = pneg %p213
        $region66: #{tpu_custom_call.1} parent=59 // pred_check_branch
          %440 = sbr.rel (%p438) target = $region68
        $region67: #{tpu_custom_call.1} parent=59 // pred_region
          %p441 = scmp.lt.s32.totalorder %s34, 0
          %s442 = scalar_select %p441, %s34, 0
          %p443 = scmp.lt.s32.totalorder %s35, 7
          %s444 = scalar_select %p443, %s35, 7
          %s445 = smul.addr %s442, 8
          %s446 = sadd.s32 %s444, %s445
          %s447 = scalar_lea.vmem %s6, %s446
        $region68: #{tpu_custom_call.1} parent=59 // pred_fallthru
          _
      $region60: #{tpu_custom_call.1} parent=5 // pred_fallthru
        _
    $region6: #{tpu_custom_call.1} parent=1 // loop_footer
      %s27 = sadd.s32 1, %s23
    $region7: #{tpu_custom_call.1} parent=1 // loop_footer_branch
      %22 = sbr.rel target = $region3
    $region8: #{tpu_custom_call.1} parent=1 // loop_exit
      _
    %448 = vsyncpa [#allocation4], 1
    %s449 = scalar_lea.sflag [#allocation4], 1
    %450 = vsyncpa %s449, 1
    %451 = vsyncpa [#allocation7], 1
    %s452 = scalar_lea.sflag [#allocation7], 1
    %453 = vsyncpa %s452, 1
    %454 = vsyncpa [#allocation5], 1
    %s455 = scalar_lea.sflag [#allocation5], 1
    %456 = vsyncpa %s455, 1

</llo_original>
